<compile_context>
chip_gen: v6e
topology: v6e:2x2x1
jax: 0.10.0
libtpu: 0.0.40
codegen_flags: <defaults>
</compile_context>

<pallas_src>
import jax
import jax.numpy as jnp
from jax import lax
from jax.experimental import pallas as pl
from jax.experimental.pallas import tpu as pltpu
import numpy as np


def convblock_kernel(x_ref, m_ref, shift_ref, pool_ref, o_ref, xpad_ref):
    # x_ref:     (Nb, Cin, H, W)        raw NCHW input block
    # m_ref:     (KH*Cin*W, W*Cout)     fused row-conv matrix (BN scale + W-pad folded in)
    # shift_ref: (1, W*Cout)            per-channel shift tiled across W
    # pool_ref:  (H, H)                 row-parity permutation (even rows, then odd rows)
    # o_ref:     (Nb, Ho, W*Cout)       pooled output, lane-dense last dim
    # xpad_ref:  (H+2, Cin*W)           VMEM scratch: H-padded, channel-interleaved rows
    nb, cin, h, w = x_ref.shape
    cw = cin * w
    kh = m_ref.shape[0] // cw
    ho = o_ref.shape[1]

    # Loop-invariant loads, hoisted out of the per-image loop.
    mat = m_ref[...]                       # (KH*Cin*W, W*Cout)
    shift = shift_ref[...]                 # (1, W*Cout)
    pperm = pool_ref[...]                  # (H, H)

    # Zero the two H-pad rows once; per-image stores only touch rows 1..H.
    xpad_ref[0:1, :] = jnp.zeros((1, cw), jnp.float32)
    xpad_ref[h + 1:h + 2, :] = jnp.zeros((1, cw), jnp.float32)

    def body(n, carry):
        # Stage image n as (H, Cin*W) interleaved rows inside the padded scratch.
        x_n = x_ref[n]                                                  # (Cin, H, W)
        xpad_ref[1:h + 1, :] = jnp.concatenate(
            [x_n[ci] for ci in range(cin)], axis=-1)                    # (H, Cin*W)

        # Single fused matmul: K = KH*Cin*W; dy windows are plain sublane slices.
        lhs = jnp.concatenate(
            [xpad_ref[pl.ds(dy, h), :] for dy in range(kh)], axis=-1)   # (H, KH*Cin*W)
        acc = jnp.dot(lhs, mat, preferred_element_type=jnp.float32)     # (H, W*Cout)

        # MaxPool2d((2,1)): parity compaction via a tiny permutation matmul on the MXU
        # (exact selection -> HIGHEST precision), then an elementwise max of two halves.
        perm = jnp.dot(pperm, acc, preferred_element_type=jnp.float32,
                       precision=lax.Precision.HIGHEST)                 # (H, W*Cout)
        pooled = jnp.maximum(perm[:ho, :], perm[ho:, :])                # (Ho, W*Cout)

        # BN shift + ReLU AFTER pooling (uniform shift & ReLU commute with max).
        o_ref[n] = jnp.maximum(pooled + shift, 0.0).astype(o_ref.dtype)
        return carry

    lax.fori_loop(0, nb, body, 0)


def conv_block(x_nchw, w_hwio, conv_bias, gamma, beta, run_mean, run_var, eps=1e-5):
    N, Cin, H, W = x_nchw.shape
    KH, KW, _, Cout = w_hwio.shape
    assert H % 2 == 0, "MaxPool2d((2,1)) needs even H"
    Ho = H // 2
    WC = W * Cout
    # Lane-density guard: full-width vst stores assume W*Cout % 128 == 0 (exactly 128
    # here).  Other channel counts are still correct but fall back to masked stores.
    assert WC % 128 == 0, "expect lane-dense output (W*Cout multiple of 128)"

    # Fold BatchNorm into the conv: scale into the weights, shift becomes the bias.
    scale = gamma / jnp.sqrt(run_var + eps)                       # (Cout,)
    w_f = w_hwio * scale                                          # (KH, KW, Cin, Cout)
    shift = beta + (conv_bias - run_mean) * scale
    shift_row = jnp.tile(shift, W).reshape(1, WC)                 # [w-major, co-minor]

    # Fused row-conv matrix: M[(dy, ci, u), (w, co)] = w_f[dy, u - w + 1, ci, co]
    # for u in {w-1, w, w+1} ∩ [0, W) -- W zero-padding folded into a static operand.
    sel = np.stack([np.eye(W, k=1 - dx, dtype=np.float32) for dx in range(KW)])  # (KW,W,W)
    m = jnp.einsum('kuw,jkic->jiuwc', sel, w_f).reshape(KH * Cin * W, WC)

    # Row-parity permutation for MaxPool2d((2,1)): first Ho rows pick even conv rows,
    # last Ho rows pick odd conv rows.
    eye = np.eye(H, dtype=np.float32)
    pool_perm = jnp.asarray(np.concatenate([eye[0::2], eye[1::2]], axis=0))       # (H,H)

    # Images per grid step: keep the grid length >= 2 so v7x can shard across its 2 TCs.
    nb = 1
    for d in range(N, 0, -1):
        if N % d == 0 and (N // d) >= 2:
            nb = d
            break

    out = pl.pallas_call(
        convblock_kernel,
        out_shape=jax.ShapeDtypeStruct((N, Ho, WC), x_nchw.dtype),
        grid_spec=pltpu.PrefetchScalarGridSpec(
            num_scalar_prefetch=0,
            grid=(N // nb,),
            in_specs=[
                pl.BlockSpec((nb, Cin, H, W), lambda b: (b, 0, 0, 0)),
                pl.BlockSpec((KH * Cin * W, WC), lambda b: (0, 0)),
                pl.BlockSpec((1, WC), lambda b: (0, 0)),
                pl.BlockSpec((H, H), lambda b: (0, 0)),
            ],
            out_specs=pl.BlockSpec((nb, Ho, WC), lambda b: (b, 0, 0)),
            scratch_shapes=[pltpu.VMEM((H + 2, Cin * W), jnp.float32)],
        ),
        compiler_params=pltpu.CompilerParams(
            dimension_semantics=("parallel",)),
    )(x_nchw, m, shift_row, pool_perm)

    # Tiny pooled-output relayout back to NCHW (4x smaller than the input).
    return jnp.transpose(out.reshape(N, Ho, W, Cout), (0, 3, 1, 2))


def reference(x_nchw, w_hwio, bias, gamma, beta, mean, var, eps=1e-5):
    x = jnp.transpose(x_nchw, (0, 2, 3, 1))
    y = jax.lax.conv_general_dilated(
        x, w_hwio, window_strides=(1, 1), padding=((1, 1), (1, 1)),
        dimension_numbers=("NHWC", "HWIO", "NHWC")) + bias
    y = (y - mean) / jnp.sqrt(var + eps) * gamma + beta
    y = jnp.maximum(y, 0.0)
    N, H, W, C = y.shape
    y = jnp.max(y.reshape(N, H // 2, 2, W, C), axis=2)
    return jnp.transpose(y, (0, 3, 1, 2))


if __name__ == "__main__":
    # Small shapes consistent with the module: ConvBlock(in_channels=4, out_channels=8)
    N, Cin, Cout, H, W = 2, 4, 8, 16, 16
    eps = 1e-5

    key = jax.random.PRNGKey(0)
    kx, kw, kb, kg, kbe, km, kv = jax.random.split(key, 7)

    x = jax.random.normal(kx, (N, Cin, H, W), jnp.float32)           # NCHW input
    w = jax.random.normal(kw, (3, 3, Cin, Cout), jnp.float32) * 0.1  # HWIO
    conv_bias = jax.random.normal(kb, (Cout,), jnp.float32) * 0.1
    gamma = jax.random.uniform(kg, (Cout,), jnp.float32, 0.5, 1.5)
    beta = jax.random.normal(kbe, (Cout,), jnp.float32) * 0.1
    run_mean = jax.random.normal(km, (Cout,), jnp.float32) * 0.1
    run_var = jax.random.uniform(kv, (Cout,), jnp.float32, 0.5, 1.5)

    out = jax.block_until_ready(
        conv_block(x, w, conv_bias, gamma, beta, run_mean, run_var, eps))
    ref = jax.block_until_ready(
        reference(x, w, conv_bias, gamma, beta, run_mean, run_var, eps))

    assert out.shape == (N, Cout, H // 2, W), out.shape
    np.testing.assert_allclose(np.asarray(out), np.asarray(ref),
                               rtol=1e-4, atol=1e-4)
    print("KERNEL_OK")
</pallas_src>

<mosaic_0001>
module attributes {stable_mosaic.version = 11 : i64} {
  func.func @convblock_kernel(%arg0: i32, %arg1: memref<1x4x16x16xf32, #tpu.memory_space<vmem>>, %arg2: memref<192x128xf32, #tpu.memory_space<vmem>>, %arg3: memref<1x128xf32, #tpu.memory_space<vmem>>, %arg4: memref<16x16xf32, #tpu.memory_space<vmem>>, %arg5: memref<1x8x128xf32, #tpu.memory_space<vmem>>, %arg6: memref<18x64xf32, #tpu.memory_space<vmem>>) attributes {dimension_semantics = [#tpu.dimension_semantics<parallel>], iteration_bounds = array<i64: 2>, scalar_prefetch = 0 : i64, scratch_operands = 1 : i64, tpu.core_type = #tpu.core_type<tc>, window_params = [{transform_indices = @transform_0, window_bounds = array<i64: 1, 4, 16, 16>}, {pipeline_mode = #tpu.pipeline_mode<synchronous>, transform_indices = @transform_1, window_bounds = array<i64: 192, 128>}, {pipeline_mode = #tpu.pipeline_mode<synchronous>, transform_indices = @transform_2, window_bounds = array<i64: 1, 128>}, {pipeline_mode = #tpu.pipeline_mode<synchronous>, transform_indices = @transform_3, window_bounds = array<i64: 16, 16>}, {transform_indices = @transform_4, window_bounds = array<i64: 1, 8, 128>}]} {
    %c0 = arith.constant 0 : index
    %c0_0 = arith.constant 0 : index
    %0 = vector.load %arg2[%c0, %c0_0] : memref<192x128xf32, #tpu.memory_space<vmem>>, vector<192x128xf32>
    %c0_1 = arith.constant 0 : index
    %c0_2 = arith.constant 0 : index
    %1 = vector.load %arg3[%c0_1, %c0_2] : memref<1x128xf32, #tpu.memory_space<vmem>>, vector<1x128xf32>
    %c0_3 = arith.constant 0 : index
    %c0_4 = arith.constant 0 : index
    %2 = vector.load %arg4[%c0_3, %c0_4] : memref<16x16xf32, #tpu.memory_space<vmem>>, vector<16x16xf32>
    %cst = arith.constant 0.000000e+00 : f32
    %3 = vector.broadcast %cst : f32 to vector<1x64xf32>
    %c0_5 = arith.constant 0 : index
    %c0_6 = arith.constant 0 : index
    %4 = vector.load %arg6[%c0_5, %c0_6] : memref<18x64xf32, #tpu.memory_space<vmem>>, vector<1x64xf32>
    tpu.vector_store %arg6[%c0_5, %c0_6], %3 {strides = array<i32>} : memref<18x64xf32, #tpu.memory_space<vmem>>, vector<1x64xf32>,
    %cst_7 = arith.constant 0.000000e+00 : f32
    %5 = vector.broadcast %cst_7 : f32 to vector<1x64xf32>
    %c17 = arith.constant 17 : index
    %c0_8 = arith.constant 0 : index
    %6 = vector.load %arg6[%c17, %c0_8] : memref<18x64xf32, #tpu.memory_space<vmem>>, vector<1x64xf32>
    tpu.vector_store %arg6[%c17, %c0_8], %5 {strides = array<i32>} : memref<18x64xf32, #tpu.memory_space<vmem>>, vector<1x64xf32>,
    %c0_i32 = arith.constant 0 : i32
    %7 = arith.index_cast %c0_i32 : i32 to index
    %c0_9 = arith.constant 0 : index
    %c0_10 = arith.constant 0 : index
    %c0_11 = arith.constant 0 : index
    %8 = vector.load %arg1[%7, %c0_9, %c0_10, %c0_11] : memref<1x4x16x16xf32, #tpu.memory_space<vmem>>, vector<1x4x16x16xf32>
    %9 = vector.shape_cast %8 : vector<1x4x16x16xf32> to vector<4x16x16xf32>
    %10 = vector.extract_strided_slice %9 {offsets = [0, 0, 0], sizes = [1, 16, 16], strides = [1, 1, 1]} : vector<4x16x16xf32> to vector<1x16x16xf32>
    %11 = vector.shape_cast %10 : vector<1x16x16xf32> to vector<16x16xf32>
    %12 = vector.extract_strided_slice %9 {offsets = [1, 0, 0], sizes = [1, 16, 16], strides = [1, 1, 1]} : vector<4x16x16xf32> to vector<1x16x16xf32>
    %13 = vector.shape_cast %12 : vector<1x16x16xf32> to vector<16x16xf32>
    %14 = vector.extract_strided_slice %9 {offsets = [2, 0, 0], sizes = [1, 16, 16], strides = [1, 1, 1]} : vector<4x16x16xf32> to vector<1x16x16xf32>
    %15 = vector.shape_cast %14 : vector<1x16x16xf32> to vector<16x16xf32>
    %16 = vector.extract_strided_slice %9 {offsets = [3, 0, 0], sizes = [1, 16, 16], strides = [1, 1, 1]} : vector<4x16x16xf32> to vector<1x16x16xf32>
    %17 = vector.shape_cast %16 : vector<1x16x16xf32> to vector<16x16xf32>
    %18 = tpu.concatenate %11, %13, %15, %17 in 1 : vector<16x16xf32>, vector<16x16xf32>, vector<16x16xf32>, vector<16x16xf32> -> vector<16x64xf32>
    %c1 = arith.constant 1 : index
    %c0_12 = arith.constant 0 : index
    %19 = vector.load %arg6[%c1, %c0_12] : memref<18x64xf32, #tpu.memory_space<vmem>>, vector<16x64xf32>
    tpu.vector_store %arg6[%c1, %c0_12], %18 {strides = array<i32>} : memref<18x64xf32, #tpu.memory_space<vmem>>, vector<16x64xf32>,
    %c0_13 = arith.constant 0 : index
    %c0_14 = arith.constant 0 : index
    %20 = vector.load %arg6[%c0_13, %c0_14] : memref<18x64xf32, #tpu.memory_space<vmem>>, vector<16x64xf32>
    %c1_15 = arith.constant 1 : index
    %c0_16 = arith.constant 0 : index
    %21 = vector.load %arg6[%c1_15, %c0_16] : memref<18x64xf32, #tpu.memory_space<vmem>>, vector<16x64xf32>
    %c2 = arith.constant 2 : index
    %c0_17 = arith.constant 0 : index
    %22 = vector.load %arg6[%c2, %c0_17] : memref<18x64xf32, #tpu.memory_space<vmem>>, vector<16x64xf32>
    %23 = tpu.concatenate %20, %21, %22 in 1 : vector<16x64xf32>, vector<16x64xf32>, vector<16x64xf32> -> vector<16x192xf32>
    %cst_18 = arith.constant dense<0.000000e+00> : vector<16x128xf32>
    %24 = tpu.matmul %23, %0, %cst_18 {dimension_numbers = #tpu.dot_dimension_numbers<[1], [0], [0], [1], [0, 0, 1, 1], [], []>} : vector<16x192xf32>, vector<192x128xf32>, vector<16x128xf32> -> vector<16x128xf32>
    %cst_19 = arith.constant dense<0.000000e+00> : vector<16x128xf32>
    %25 = tpu.matmul %2, %24, %cst_19 {dimension_numbers = #tpu.dot_dimension_numbers<[1], [0], [0], [1], [0, 0, 1, 1], [], []>, precision = #tpu.contract_precision<fp32>} : vector<16x16xf32>, vector<16x128xf32>, vector<16x128xf32> -> vector<16x128xf32>
    %26 = vector.extract_strided_slice %25 {offsets = [0, 0], sizes = [8, 128], strides = [1, 1]} : vector<16x128xf32> to vector<8x128xf32>
    %27 = vector.extract_strided_slice %25 {offsets = [8, 0], sizes = [8, 128], strides = [1, 1]} : vector<16x128xf32> to vector<8x128xf32>
    %28 = arith.maximumf %26, %27 : vector<8x128xf32>
    %29 = vector.broadcast %1 : vector<1x128xf32> to vector<8x128xf32>
    %30 = arith.addf %28, %29 : vector<8x128xf32>
    %cst_20 = arith.constant 0.000000e+00 : f32
    %31 = vector.broadcast %cst_20 : f32 to vector<8x128xf32>
    %32 = arith.maximumf %30, %31 : vector<8x128xf32>
    %33 = arith.index_cast %c0_i32 : i32 to index
    %c0_21 = arith.constant 0 : index
    %c0_22 = arith.constant 0 : index
    %34 = vector.load %arg5[%33, %c0_21, %c0_22] : memref<1x8x128xf32, #tpu.memory_space<vmem>>, vector<1x8x128xf32>
    %35 = vector.shape_cast %34 : vector<1x8x128xf32> to vector<8x128xf32>
    %36 = vector.shape_cast %32 : vector<8x128xf32> to vector<1x8x128xf32>
    tpu.vector_store %arg5[%33, %c0_21, %c0_22], %36 {strides = array<i32>} : memref<1x8x128xf32, #tpu.memory_space<vmem>>, vector<1x8x128xf32>,
    %c1_i32 = arith.constant 1 : i32
    return
  }
  func.func @transform_0(%arg0: i32) -> (i32, i32, i32, i32) {
    %c0_i32 = arith.constant 0 : i32
    %c0_i32_0 = arith.constant 0 : i32
    %c0_i32_1 = arith.constant 0 : i32
    %c0_i32_2 = arith.constant 0 : i32
    return %arg0, %c0_i32, %c0_i32_0, %c0_i32_1 : i32, i32, i32, i32
  }
  func.func @transform_1(%arg0: i32) -> (i32, i32) {
    %c0_i32 = arith.constant 0 : i32
    %c0_i32_0 = arith.constant 0 : i32
    %c0_i32_1 = arith.constant 0 : i32
    return %c0_i32, %c0_i32_0 : i32, i32
  }
  func.func @transform_2(%arg0: i32) -> (i32, i32) {
    %c0_i32 = arith.constant 0 : i32
    %c0_i32_0 = arith.constant 0 : i32
    %c0_i32_1 = arith.constant 0 : i32
    return %c0_i32, %c0_i32_0 : i32, i32
  }
  func.func @transform_3(%arg0: i32) -> (i32, i32) {
    %c0_i32 = arith.constant 0 : i32
    %c0_i32_0 = arith.constant 0 : i32
    %c0_i32_1 = arith.constant 0 : i32
    return %c0_i32, %c0_i32_0 : i32, i32
  }
  func.func @transform_4(%arg0: i32) -> (i32, i32, i32) {
    %c0_i32 = arith.constant 0 : i32
    %c0_i32_0 = arith.constant 0 : i32
    %c0_i32_1 = arith.constant 0 : i32
    return %arg0, %c0_i32, %c0_i32_0 : i32, i32, i32
  }
}

</mosaic_0001>

<llo_original>
// kernel: tpu_custom_call.1
$region0: #{tpu_custom_call.1}
  #allocation0 [shape = 'u32[]', space=smem, size = 0x4, offset = 0x4, fixed_abs, tag = 'smem constant byte address 0x4 - core index']
  #allocation1 [shape = 'u32[144,128]{1,0:T(1,128)}', space=vmem, size = 0x12000, scoped, tag = 'internal scratch']
  #allocation2 [shape = 'f32[18,64]{1,0:T(8,128)}', space=vmem, size = 0x3000, scoped, tag = 'scratch operand']
  %s0 = inlined_call_operand.hbm [shape: f32[2,4,16,16], index: 0, kind: input, shape index: {}]
  %s1 = inlined_call_operand.hbm [shape: f32[192,128], index: 1, kind: input, shape index: {}]
  %s2 = inlined_call_operand.vmem [shape: f32[1,128], index: 2, kind: input, shape index: {}]
  %s3 = inlined_call_operand.hbm [shape: f32[16,16], index: 3, kind: input, shape index: {}]
  %s4 = inlined_call_operand.hbm [shape: f32[2,8,128], index: 4, kind: output, shape index: {}]
  %s5 = sld [smem:[#allocation0]]
  $region61: #{tpu_custom_call.1} parent=0
    _
  %s7 = ssub.s32 1, %s5
  %s8 = scalar_select 0, %s7, %s5
  $region1: #{tpu_custom_call.1} parent=0
    #allocation3 [shape = 'u8[65536]{0}', space=vmem, size = 0x10000, scoped, tag = 'input window, operand 0']
    #allocation4 [shape = 's32[2]{0}', space=sflag, size = 0x8, scoped, tag = 'scoped memory for tpu_custom_call.1']
    #allocation5 [shape = 's32[2]{0}', space=sflag, size = 0x8, scoped, tag = 'scoped memory for tpu_custom_call.1']
    #allocation6 [shape = 'u8[98304]{0}', space=vmem, size = 0x18000, scoped, tag = 'input window, operand 1, single buffered']
    #allocation7 [shape = 's32[1]{0}', space=sflag, size = 0x4, scoped, tag = 'scoped memory for tpu_custom_call.1']
    #allocation8 [shape = 'u8[8192]{0}', space=vmem, size = 0x2000, scoped, tag = 'input window, operand 3, single buffered']
    #allocation9 [shape = 'u8[8192]{0}', space=vmem, size = 0x2000, scoped, tag = 'output window, operand 0']
    %9 = vsyncpa [#allocation4], 0
    %s10 = scalar_lea.sflag [#allocation4], 1
    %11 = vsyncpa %s10, 0
    %12 = vsyncpa [#allocation7], 0
    %13 = vsyncpa [#allocation5], 0
    %s14 = scalar_lea.sflag [#allocation5], 1
    %15 = vsyncpa %s14, 0
    loop: start=0, step=1, limit=4
    $region2: #{tpu_custom_call.1} parent=1 // loop_pre_header
      _
    $region3: #{tpu_custom_call.1} parent=1 // loop_header
      %s17 = sphi 0, %s21
      %p18 = scmp.ge.s32.totalorder %s17, 4
      %s27 = sphi 0, %s29
      %s30 = sphi 0, %s27
      %s31 = sphi 0, %s30
      %s47 = sphi 0, %s31
      %s51 = sphi 0, %s51
      %s53 = sphi 0, %s51
      %s54 = sphi 0, %s53
      %s68 = sphi 0, %s54
      %s72 = sphi 0, %s72
      %s74 = sphi 0, %s72
      %s75 = sphi 0, %s74
      %s89 = sphi 0, %s75
      %s93 = sphi 0, %s93
      %s95 = sphi 0, %s93
      %s96 = sphi 0, %s95
      %s110 = sphi 0, %s96
      %s116 = sphi 0, %s118
      %s119 = sphi 0, %s116
      %s120 = sphi 0, %s119
      %s136 = sphi 0, %s120
    $region4: #{tpu_custom_call.1} parent=1 // loop_header_branch
      %20 = sbr.rel (%p18) target = $region8
    $region5: #{tpu_custom_call.1} parent=1 // loop_body
      %s22 = ssub.s32 %s17, 1
      %s23 = ssub.s32 %s17, 2
      %s24 = sadd.s32 %s17, 1
      %s25 = ssub.s32 %s17, %s24
      %p26 = scmp.eq.s32.totalorder %s25, 0
      %s28 = sadd.s32 %s27, 1
      %s29 = scalar_select %p26, %s27, %s28
      %p32 = pneg %p26
      %p33 = scmp.eq.s32.totalorder %s17, 1
      %p34 = por %p32, %p33
      %p35 = scmp.ne.s32.totalorder %s27, %s30
      %p36 = scmp.eq.s32.totalorder %s17, 0
      %p37 = por %p35, %p36
      %p38 = scmp.ne.s32.totalorder %s27, %s30
      %p39 = scmp.eq.s32.totalorder %s22, 1
      %p40 = por %p38, %p39
      %p41 = scmp.ne.s32.totalorder %s30, %s31
      %p42 = scmp.eq.s32.totalorder %s22, 0
      %p43 = por %p41, %p42
      %p44 = scmp.ne.s32.totalorder %s30, %s31
      %p45 = scmp.eq.s32.totalorder %s23, 1
      %p46 = por %p44, %p45
      %p48 = scmp.ne.s32.totalorder %s31, %s47
      %p49 = scmp.eq.s32.totalorder %s23, 0
      %p50 = por %p48, %p49
      %s52 = sadd.s32 %s51, 1
      %p55 = scmp.eq.s32.totalorder %s17, 1
      %p56 = scmp.ne.s32.totalorder %s51, %s53
      %p57 = scmp.eq.s32.totalorder %s17, 0
      %p58 = por %p56, %p57
      %p59 = scmp.ne.s32.totalorder %s51, %s53
      %p60 = scmp.eq.s32.totalorder %s22, 1
      %p61 = por %p59, %p60
      %p62 = scmp.ne.s32.totalorder %s53, %s54
      %p63 = scmp.eq.s32.totalorder %s22, 0
      %p64 = por %p62, %p63
      %p65 = scmp.ne.s32.totalorder %s53, %s54
      %p66 = scmp.eq.s32.totalorder %s23, 1
      %p67 = por %p65, %p66
      %p69 = scmp.ne.s32.totalorder %s54, %s68
      %p70 = scmp.eq.s32.totalorder %s23, 0
      %p71 = por %p69, %p70
      %s73 = sadd.s32 %s72, 1
      %p76 = scmp.eq.s32.totalorder %s17, 1
      %p77 = scmp.ne.s32.totalorder %s72, %s74
      %p78 = scmp.eq.s32.totalorder %s17, 0
      %p79 = por %p77, %p78
      %p80 = scmp.ne.s32.totalorder %s72, %s74
      %p81 = scmp.eq.s32.totalorder %s22, 1
      %p82 = por %p80, %p81
      %p83 = scmp.ne.s32.totalorder %s74, %s75
      %p84 = scmp.eq.s32.totalorder %s22, 0
      %p85 = por %p83, %p84
      %p86 = scmp.ne.s32.totalorder %s74, %s75
      %p87 = scmp.eq.s32.totalorder %s23, 1
      %p88 = por %p86, %p87
      %p90 = scmp.ne.s32.totalorder %s75, %s89
      %p91 = scmp.eq.s32.totalorder %s23, 0
      %p92 = por %p90, %p91
      %s94 = sadd.s32 %s93, 1
      %p97 = scmp.eq.s32.totalorder %s17, 1
      %p98 = scmp.ne.s32.totalorder %s93, %s95
      %p99 = scmp.eq.s32.totalorder %s17, 0
      %p100 = por %p98, %p99
      %p101 = scmp.ne.s32.totalorder %s93, %s95
      %p102 = scmp.eq.s32.totalorder %s22, 1
      %p103 = por %p101, %p102
      %p104 = scmp.ne.s32.totalorder %s95, %s96
      %p105 = scmp.eq.s32.totalorder %s22, 0
      %p106 = por %p104, %p105
      %p107 = scmp.ne.s32.totalorder %s95, %s96
      %p108 = scmp.eq.s32.totalorder %s23, 1
      %p109 = por %p107, %p108
      %p111 = scmp.ne.s32.totalorder %s96, %s110
      %p112 = scmp.eq.s32.totalorder %s23, 0
      %p113 = por %p111, %p112
      %s114 = ssub.s32 %s17, %s24
      %p115 = scmp.eq.s32.totalorder %s114, 0
      %s117 = sadd.s32 %s116, 1
      %s118 = scalar_select %p115, %s116, %s117
      %p121 = pneg %p115
      %p122 = scmp.eq.s32.totalorder %s17, 1
      %p123 = por %p121, %p122
      %p124 = scmp.ne.s32.totalorder %s116, %s119
      %p125 = scmp.eq.s32.totalorder %s17, 0
      %p126 = por %p124, %p125
      %p127 = scmp.ne.s32.totalorder %s116, %s119
      %p128 = scmp.eq.s32.totalorder %s22, 1
      %p129 = por %p127, %p128
      %p130 = scmp.ne.s32.totalorder %s119, %s120
      %p131 = scmp.eq.s32.totalorder %s22, 0
      %p132 = por %p130, %p131
      %p133 = scmp.ne.s32.totalorder %s119, %s120
      %p134 = scmp.eq.s32.totalorder %s23, 1
      %p135 = por %p133, %p134
      %p137 = scmp.ne.s32.totalorder %s120, %s136
      %p138 = scmp.eq.s32.totalorder %s23, 0
      %p139 = por %p137, %p138
      %p140 = scmp.le.s32.totalorder 1, %s17
      %p141 = scmp.lt.s32.totalorder %s17, 3
      %p142 = pnand %p140, %p141
      %p143 = pneg %p142
      // Predicated region
      $region9: #{tpu_custom_call.1} parent=5 // pred_check
        _
      $region10: #{tpu_custom_call.1} parent=5 // pred_check_branch
        %145 = sbr.rel (%p142) target = $region12
      $region11: #{tpu_custom_call.1} parent=5 // pred_region
        %s146 = ssub.s32 %s17, 1
        // Predicated region
        $region13: #{tpu_custom_call.1} parent=11 // pred_check
          %p147 = pneg %p64
        $region14: #{tpu_custom_call.1} parent=11 // pred_check_branch
          %149 = sbr.rel (%p147) target = $region16
        $region15: #{tpu_custom_call.1} parent=11 // pred_region
          %s151 = ssub.s32 3072, 3072
          %152 = vsyncadd [#allocation7], %s151
          %s153 = sshll.u32 [#allocation6], 4
          %s154 = int_to_ptr.vmem [resolvable:$true] %s153
          %159 = dma.hbm_to_vmem [thread:$0]  %s1, 3072, %s154, [#allocation7], 128, 128, 8
        $region16: #{tpu_custom_call.1} parent=11 // pred_fallthru
          _
        // Predicated region
        $region17: #{tpu_custom_call.1} parent=11 // pred_check
          %p160 = pneg %p85
        $region18: #{tpu_custom_call.1} parent=11 // pred_check_branch
          %162 = sbr.rel (%p160) target = $region20
        $region19: #{tpu_custom_call.1} parent=11 // pred_region
          _
        $region20: #{tpu_custom_call.1} parent=11 // pred_fallthru
          _
        // Predicated region
        $region21: #{tpu_custom_call.1} parent=11 // pred_check
          %p163 = pneg %p106
        $region22: #{tpu_custom_call.1} parent=11 // pred_check_branch
          %165 = sbr.rel (%p163) target = $region24
        $region23: #{tpu_custom_call.1} parent=11 // pred_region
          %s167 = ssub.s32 256, 256
          %168 = vsyncadd [#allocation7], %s167
          %s169 = sshll.u32 [#allocation8], 4
          %s170 = int_to_ptr.vmem [resolvable:$true] %s169
          %175 = dma.hbm_to_vmem [thread:$0]  %s3, 256, %s170, [#allocation7], 128, 128, 8
        $region24: #{tpu_custom_call.1} parent=11 // pred_fallthru
          _
      $region12: #{tpu_custom_call.1} parent=5 // pred_fallthru
        _
      %p176 = scmp.lt.s32.totalorder %s17, 2
      // Predicated region
      $region25: #{tpu_custom_call.1} parent=5 // pred_check
        %p177 = pneg %p176
      $region26: #{tpu_custom_call.1} parent=5 // pred_check_branch
        %179 = sbr.rel (%p177) target = $region28
      $region27: #{tpu_custom_call.1} parent=5 // pred_region
        // Predicated region
        $region29: #{tpu_custom_call.1} parent=27 // pred_check
          %p180 = pneg %p37
        $region30: #{tpu_custom_call.1} parent=27 // pred_check_branch
          %182 = sbr.rel (%p180) target = $region32
        $region31: #{tpu_custom_call.1} parent=27 // pred_region
          %s183 = sand.u32 %s27, 1
          %s184 = scalar_lea.sflag [#allocation4], %s183
          %s185 = sand.u32 %s27, 1
          %s186 = smul.addr %s185, 64
          %s187 = scalar_lea.vmem [#allocation3], %s186
          %s189 = ssub.s32 1024, 1024
          %190 = vsyncadd %s184, %s189
          %s191 = smul.addr %s17, 8
          %s192 = smul.addr %s191, 128
          %s193 = scalar_lea.hbm %s0, %s192
          %s194 = sshll.u32 %s187, 4
          %s195 = int_to_ptr.vmem [resolvable:$true] %s194
          %200 = dma.hbm_to_vmem [thread:$0]  %s193, 1024, %s195, %s184, 128, 128, 8
        $region32: #{tpu_custom_call.1} parent=27 // pred_fallthru
          _
      $region28: #{tpu_custom_call.1} parent=5 // pred_fallthru
        _
      %p201 = scmp.le.s32.totalorder 1, %s17
      %p202 = scmp.lt.s32.totalorder %s17, 3
      %p203 = pnand %p201, %p202
      %p204 = pneg %p203
      // Predicated region
      $region33: #{tpu_custom_call.1} parent=5 // pred_check
        _
      $region34: #{tpu_custom_call.1} parent=5 // pred_check_branch
        %206 = sbr.rel (%p203) target = $region36
      $region35: #{tpu_custom_call.1} parent=5 // pred_region
        %s207 = ssub.s32 %s17, 1
        %s208 = sand.u32 %s30, 1
        %s209 = scalar_lea.sflag [#allocation4], %s208
        %s210 = sand.u32 %s30, 1
        %s211 = smul.addr %s210, 64
        %s212 = scalar_lea.vmem [#allocation3], %s211
        // Predicated region
        $region37: #{tpu_custom_call.1} parent=35 // pred_check
          %p213 = pneg %p43
        $region38: #{tpu_custom_call.1} parent=35 // pred_check_branch
          %215 = sbr.rel (%p213) target = $region40
        $region39: #{tpu_custom_call.1} parent=35 // pred_region
          %216 = dma.done %s209, 1024
        $region40: #{tpu_custom_call.1} parent=35 // pred_fallthru
          _
        // Predicated region
        $region41: #{tpu_custom_call.1} parent=35 // pred_check
          %p217 = pneg %p64
        $region42: #{tpu_custom_call.1} parent=35 // pred_check_branch
          %219 = sbr.rel (%p217) target = $region44
        $region43: #{tpu_custom_call.1} parent=35 // pred_region
          %220 = dma.done [#allocation7], 3072
        $region44: #{tpu_custom_call.1} parent=35 // pred_fallthru
          _
        // Predicated region
        $region45: #{tpu_custom_call.1} parent=35 // pred_check
          %p221 = pneg %p106
        $region46: #{tpu_custom_call.1} parent=35 // pred_check_branch
          %223 = sbr.rel (%p221) target = $region48
        $region47: #{tpu_custom_call.1} parent=35 // pred_region
          %224 = dma.done [#allocation7], 256
        $region48: #{tpu_custom_call.1} parent=35 // pred_fallthru
          _
        %s225 = sand.u32 %s30, 1
        %s226 = scalar_lea.sflag [#allocation4], %s225
        %s227 = sand.u32 %s30, 1
        %s228 = smul.addr %s227, 64
        %s229 = scalar_lea.vmem [#allocation3], %s228
        %p230 = pneg %p43
        %p231 = pneg %p40
        %p232 = pneg %p64
        %p233 = pneg %p61
        %p234 = pneg %p85
        %p235 = pneg %p82
        %p236 = pneg %p106
        %p237 = pneg %p103
        %p238 = pneg %p132
        %p239 = pneg %p129
        %s240 = sand.u32 %s119, 1
        %s241 = scalar_lea.sflag [#allocation5], %s240
        %s242 = sand.u32 %s119, 1
        %s243 = smul.addr %s242, 8
        %s244 = scalar_lea.vmem [#allocation9], %s243
        %v245 = vld [vmem:[#allocation6] sm:$0xff]
        %v246 = vld [vmem:[#allocation6 + $0x8] sm:$0xff]
        %v247 = vld [vmem:[#allocation6 + $0x10] sm:$0xff]
        %v248 = vld [vmem:[#allocation6 + $0x18] sm:$0xff]
        %v249 = vld [vmem:[#allocation6 + $0x20] sm:$0xff]
        %v250 = vld [vmem:[#allocation6 + $0x28] sm:$0xff]
        %v251 = vld [vmem:[#allocation6 + $0x30] sm:$0xff]
        %v252 = vld [vmem:[#allocation6 + $0x38] sm:$0xff]
        %v253 = vld [vmem:[#allocation6 + $0x40] sm:$0xff]
        %v254 = vld [vmem:[#allocation6 + $0x48] sm:$0xff]
        %v255 = vld [vmem:[#allocation6 + $0x50] sm:$0xff]
        %v256 = vld [vmem:[#allocation6 + $0x58] sm:$0xff]
        %v257 = vld [vmem:[#allocation6 + $0x60] sm:$0xff]
        %v258 = vld [vmem:[#allocation6 + $0x68] sm:$0xff]
        %v259 = vld [vmem:[#allocation6 + $0x70] sm:$0xff]
        %v260 = vld [vmem:[#allocation6 + $0x78] sm:$0xff]
        %v261 = vld [vmem:[#allocation6 + $0x80] sm:$0xff]
        %v262 = vld [vmem:[#allocation6 + $0x88] sm:$0xff]
        %v263 = vld [vmem:[#allocation6 + $0x90] sm:$0xff]
        %v264 = vld [vmem:[#allocation6 + $0x98] sm:$0xff]
        %v265 = vld [vmem:[#allocation6 + $0xa0] sm:$0xff]
        %v266 = vld [vmem:[#allocation6 + $0xa8] sm:$0xff]
        %v267 = vld [vmem:[#allocation6 + $0xb0] sm:$0xff]
        %v268 = vld [vmem:[#allocation6 + $0xb8] sm:$0xff]
        %v269 = vld [vmem:[%s2] sm:$0x1]
        %v270 = vld [vmem:[#allocation8] sm:$0xff]
        %v271 = vld [vmem:[#allocation8 + $0x8] sm:$0xff]
        %vm272 = vcmask 516096
        %273 = vst.msk [vmem:[#allocation2] sm:$0x1] %vm272, 0.0
        %274 = vst.msk [vmem:[#allocation2 + $0x11] sm:$0x1] %vm272, 0.0
        %v275 = vld [vmem:[%s212] sm:$0xff]
        %v276 = vld [vmem:[%s212 + $0x8] sm:$0xff]
        %v277 = vld [vmem:[%s212 + $0x10] sm:$0xff]
        %v278 = vld [vmem:[%s212 + $0x18] sm:$0xff]
        %v279 = vld [vmem:[%s212 + $0x20] sm:$0xff]
        %v280 = vld [vmem:[%s212 + $0x28] sm:$0xff]
        %v281 = vld [vmem:[%s212 + $0x30] sm:$0xff]
        %v282 = vld [vmem:[%s212 + $0x38] sm:$0xff]
        %285 = vrot.lane.b32.xlu0 %v277, 16
        %v286 = vpop.permute.xlu0 %285
        %287 = vrot.lane.b32.xlu0 %v278, 16
        %v288 = vpop.permute.xlu0 %287
        %293 = vrot.lane.b32.xlu0 %v279, 32
        %v294 = vpop.permute.xlu0 %293
        %295 = vrot.lane.b32.xlu0 %v280, 32
        %v296 = vpop.permute.xlu0 %295
        %301 = vrot.lane.b32.xlu0 %v281, 48
        %v302 = vpop.permute.xlu0 %301
        %303 = vrot.lane.b32.xlu0 %v282, 48
        %v304 = vpop.permute.xlu0 %303
        %vm307 = vcmask 130048
        %v308 = vsel %vm307, %v275, %v286
        %v309 = vsel %vm307, %v276, %v288
        %vm310 = vcmask 261120
        %v311 = vsel %vm310, %v308, %v294
        %v312 = vsel %vm310, %v309, %v296
        %vm313 = vcmask 392192
        %v314 = vsel %vm313, %v311, %v302
        %v315 = vsel %vm313, %v312, %v304
        %vm316 = vcmask 523264
        %317 = vst.msk [vmem:[#allocation2 + $0x1] sm:$0xff] %vm316, %v314
        %318 = vst.msk [vmem:[#allocation2 + $0x9] sm:$0xff] %vm316, %v315
        %v319 = vld [vmem:[#allocation2] sm:$0xff]
        %v320 = vld [vmem:[#allocation2 + $0x8] sm:$0xff]
        %v321 = vld [vmem:[#allocation2 + $0x1] sm:$0xff]
        %v322 = vld [vmem:[#allocation2 + $0x9] sm:$0xff]
        %v323 = vld [vmem:[#allocation2 + $0x2] sm:$0xff]
        %v324 = vld [vmem:[#allocation2 + $0xa] sm:$0xff]
        %327 = vrot.lane.b32.xlu0 %v321, 64
        %v328 = vpop.permute.xlu0 %327
        %329 = vrot.lane.b32.xlu0 %v322, 64
        %v330 = vpop.permute.xlu0 %329
        %v333 = vsel %vm316, %v319, %v328
        %v334 = vsel %vm316, %v320, %v330
        %v336 = vsel %vm316, %v323, 0
        %v339 = vsel %vm316, %v324, 0
        %341 = vmatprep.subr.mxu0 0.0
        %342 = vmatpush1.msra.mxu0 %v260
        %343 = vmatprep.subr.mxu0 0.0
        %344 = vmatpush1.msra.mxu0 %v259
        %345 = vmatprep.subr.mxu0 0.0
        %346 = vmatpush1.msra.mxu0 %v258
        %347 = vmatprep.subr.mxu0 0.0
        %348 = vmatpush1.msra.mxu0 %v257
        %349 = vmatprep.subr.mxu0 0.0
        %350 = vmatpush1.msra.mxu0 %v256
        %351 = vmatprep.subr.mxu0 0.0
        %352 = vmatpush1.msra.mxu0 %v255
        %353 = vmatprep.subr.mxu0 0.0
        %354 = vmatpush1.msra.mxu0 %v254
        %355 = vmatprep.subr.mxu0 0.0
        %356 = vmatpush1.msra.mxu0 %v253
        %357 = vmatprep.subr.mxu0 0.0
        %358 = vmatpush1.msra.mxu0 %v252
        %359 = vmatprep.subr.mxu0 0.0
        %360 = vmatpush1.msra.mxu0 %v251
        %361 = vmatprep.subr.mxu0 0.0
        %362 = vmatpush1.msra.mxu0 %v250
        %363 = vmatprep.subr.mxu0 0.0
        %364 = vmatpush1.msra.mxu0 %v249
        %365 = vmatprep.subr.mxu0 0.0
        %366 = vmatpush1.msra.mxu0 %v248
        %367 = vmatprep.subr.mxu0 0.0
        %368 = vmatpush1.msra.mxu0 %v247
        %369 = vmatprep.subr.mxu0 0.0
        %370 = vmatpush1.msra.mxu0 %v246
        %371 = vmatprep.subr.mxu0 0.0
        %372 = vmatpush1.msra.mxu0 %v245
        %373 = vmatprep.subr.mxu0 0.0
        %374 = vmatpush2.msra.mxu0 0.0
        %375 = vmatprep.subr.mxu0 0.0
        %376 = vmatpush2.msra.mxu0 0.0
        %377 = vmatprep.subr.mxu0 0.0
        %378 = vmatpush2.msra.mxu0 0.0
        %379 = vmatprep.subr.mxu0 0.0
        %380 = vmatpush2.msra.mxu0 0.0
        %381 = vmatprep.subr.mxu0 0.0
        %382 = vmatpush2.msra.mxu0 0.0
        %383 = vmatprep.subr.mxu0 0.0
        %384 = vmatpush2.msra.mxu0 0.0
        %385 = vmatprep.subr.mxu0 0.0
        %386 = vmatpush2.msra.mxu0 0.0
        %387 = vmatprep.subr.mxu0 0.0
        %388 = vmatpush2.msra.mxu0 0.0
        %389 = vmatprep.subr.mxu0 0.0
        %390 = vmatpush2.msra.mxu0 %v268
        %391 = vmatprep.subr.mxu0 0.0
        %392 = vmatpush2.msra.mxu0 %v267
        %393 = vmatprep.subr.mxu0 0.0
        %394 = vmatpush2.msra.mxu0 %v266
        %395 = vmatprep.subr.mxu0 0.0
        %396 = vmatpush2.msra.mxu0 %v265
        %397 = vmatprep.subr.mxu0 0.0
        %398 = vmatpush2.msra.mxu0 %v264
        %399 = vmatprep.subr.mxu0 0.0
        %400 = vmatpush2.msra.mxu0 %v263
        %401 = vmatprep.subr.mxu0 0.0
        %402 = vmatpush2.msra.mxu0 %v262
        %403 = vmatprep.subr.mxu0 0.0
        %404 = vmatpush2.msra.mxu0 %v261
        %405 = vmatprep.mubr.f32.mxu0 %v336
        %406 = vmatmul.mubr.f32.gmra.mxu0 %v333
        %v407 = vpop.f32.mrf.mxu0
        %v408 = vadd.f32 0.0, %v407
        %v409 = vpop.f32.mrf.mxu0
        %410 = vmatprep.mubr.f32.mxu0 %v339
        %411 = vmatmul.mubr.f32.gmra.mxu0 %v334
        %v412 = vpop.f32.mrf.mxu0
        %v413 = vadd.f32 0.0, %v412
        %v414 = vpop.f32.mrf.mxu0
        %415 = vdwg.mxu0
        %v417 = vsel %vm307, %v270, 0
        %v420 = vsel %vm307, %v271, 0
        %422 = vmatprep.subr.mxu0 0.0
        %423 = vmatpush1.msra.mxu0 0.0
        %424 = vmatprep.subr.mxu0 0.0
        %425 = vmatpush1.msra.mxu0 0.0
        %426 = vmatprep.subr.mxu0 0.0
        %427 = vmatpush1.msra.mxu0 0.0
        %428 = vmatprep.subr.mxu0 0.0
        %429 = vmatpush1.msra.mxu0 0.0
        %430 = vmatprep.subr.mxu0 0.0
        %431 = vmatpush1.msra.mxu0 0.0
        %432 = vmatprep.subr.mxu0 0.0
        %433 = vmatpush1.msra.mxu0 0.0
        %434 = vmatprep.subr.mxu0 0.0
        %435 = vmatpush1.msra.mxu0 0.0
        %436 = vmatprep.subr.mxu0 0.0
        %437 = vmatpush1.msra.mxu0 0.0
        %438 = vmatprep.subr.mxu0 0.0
        %439 = vmatpush1.msra.mxu0 0.0
        %440 = vmatprep.subr.mxu0 0.0
        %441 = vmatpush1.msra.mxu0 0.0
        %442 = vmatprep.subr.mxu0 0.0
        %443 = vmatpush1.msra.mxu0 0.0
        %444 = vmatprep.subr.mxu0 0.0
        %445 = vmatpush1.msra.mxu0 0.0
        %446 = vmatprep.subr.mxu0 0.0
        %447 = vmatpush1.msra.mxu0 0.0
        %448 = vmatprep.subr.mxu0 0.0
        %449 = vmatpush1.msra.mxu0 0.0
        %450 = vmatprep.subr.mxu0 0.0
        %v451 = vand.u32 %v413, 4294901760
        %452 = vmatpush1.msra.mxu0 %v451
        %453 = vmatprep.subr.mxu0 0.0
        %v454 = vand.u32 %v408, 4294901760
        %455 = vmatpush1.msra.mxu0 %v454
        %456 = vmatprep.subr.mxu0 0.0
        %457 = vmatpush2.msra.mxu0 0.0
        %458 = vmatprep.subr.mxu0 0.0
        %459 = vmatpush2.msra.mxu0 0.0
        %460 = vmatprep.subr.mxu0 0.0
        %461 = vmatpush2.msra.mxu0 0.0
        %462 = vmatprep.subr.mxu0 0.0
        %463 = vmatpush2.msra.mxu0 0.0
        %464 = vmatprep.subr.mxu0 0.0
        %465 = vmatpush2.msra.mxu0 0.0
        %466 = vmatprep.subr.mxu0 0.0
        %467 = vmatpush2.msra.mxu0 0.0
        %468 = vmatprep.subr.mxu0 0.0
        %469 = vmatpush2.msra.mxu0 0.0
        %470 = vmatprep.subr.mxu0 0.0
        %471 = vmatpush2.msra.mxu0 0.0
        %472 = vmatprep.subr.mxu0 0.0
        %473 = vmatpush2.msra.mxu0 0.0
        %474 = vmatprep.subr.mxu0 0.0
        %475 = vmatpush2.msra.mxu0 0.0
        %476 = vmatprep.subr.mxu0 0.0
        %477 = vmatpush2.msra.mxu0 0.0
        %478 = vmatprep.subr.mxu0 0.0
        %479 = vmatpush2.msra.mxu0 0.0
        %480 = vmatprep.subr.mxu0 0.0
        %481 = vmatpush2.msra.mxu0 0.0
        %482 = vmatprep.subr.mxu0 0.0
        %483 = vmatpush2.msra.mxu0 0.0
        %484 = vmatprep.subr.mxu0 0.0
        %485 = vmatpush2.msra.mxu0 0.0
        %486 = vmatprep.subr.mxu0 0.0
        %487 = vmatpush2.msra.mxu0 0.0
        %488 = vmatprep.mubr.f32.mxu0 0.0
        %v489 = vand.u32 %v417, 4294901760
        %v490 = vsub.f32 %v417, %v489
        %v491 = vand.u32 %v490, 4294901760
        %v492 = vsub.f32 %v490, %v491
        %v493 = vand.u32 %v492, 4294901760
        %494 = vmatmul.mubr.f32.gmra.mxu0 %v493
        %v495 = vpop.f32.mrf.mxu0
        %v496 = vadd.f32 0.0, %v495
        %v497 = vpop.f32.mrf.mxu0
        %498 = vmatprep.mubr.f32.mxu0 0.0
        %v499 = vand.u32 %v420, 4294901760
        %v500 = vsub.f32 %v420, %v499
        %v501 = vand.u32 %v500, 4294901760
        %v502 = vsub.f32 %v500, %v501
        %v503 = vand.u32 %v502, 4294901760
        %504 = vmatmul.mubr.f32.gmra.mxu0 %v503
        %v505 = vpop.f32.mrf.mxu0
        %v506 = vadd.f32 0.0, %v505
        %v507 = vpop.f32.mrf.mxu0
        %508 = vdwg.mxu0
        %509 = vmatprep.subr.mxu0 0.0
        %510 = vmatpush1.msra.mxu0 0.0
        %511 = vmatprep.subr.mxu0 0.0
        %512 = vmatpush1.msra.mxu0 0.0
        %513 = vmatprep.subr.mxu0 0.0
        %514 = vmatpush1.msra.mxu0 0.0
        %515 = vmatprep.subr.mxu0 0.0
        %516 = vmatpush1.msra.mxu0 0.0
        %517 = vmatprep.subr.mxu0 0.0
        %518 = vmatpush1.msra.mxu0 0.0
        %519 = vmatprep.subr.mxu0 0.0
        %520 = vmatpush1.msra.mxu0 0.0
        %521 = vmatprep.subr.mxu0 0.0
        %522 = vmatpush1.msra.mxu0 0.0
        %523 = vmatprep.subr.mxu0 0.0
        %524 = vmatpush1.msra.mxu0 0.0
        %525 = vmatprep.subr.mxu0 0.0
        %526 = vmatpush1.msra.mxu0 0.0
        %527 = vmatprep.subr.mxu0 0.0
        %528 = vmatpush1.msra.mxu0 0.0
        %529 = vmatprep.subr.mxu0 0.0
        %530 = vmatpush1.msra.mxu0 0.0
        %531 = vmatprep.subr.mxu0 0.0
        %532 = vmatpush1.msra.mxu0 0.0
        %533 = vmatprep.subr.mxu0 0.0
        %534 = vmatpush1.msra.mxu0 0.0
        %535 = vmatprep.subr.mxu0 0.0
        %536 = vmatpush1.msra.mxu0 0.0
        %537 = vmatprep.subr.mxu0 0.0
        %v538 = vand.u32 %v413, 4294901760
        %v539 = vsub.f32 %v413, %v538
        %v540 = vand.u32 %v539, 4294901760
        %v541 = vsub.f32 %v539, %v540
        %v542 = vand.u32 %v541, 4294901760
        %543 = vmatpush1.msra.mxu0 %v542
        %544 = vmatprep.subr.mxu0 0.0
        %v545 = vand.u32 %v408, 4294901760
        %v546 = vsub.f32 %v408, %v545
        %v547 = vand.u32 %v546, 4294901760
        %v548 = vsub.f32 %v546, %v547
        %v549 = vand.u32 %v548, 4294901760
        %550 = vmatpush1.msra.mxu0 %v549
        %551 = vmatprep.subr.mxu0 0.0
        %552 = vmatpush2.msra.mxu0 0.0
        %553 = vmatprep.subr.mxu0 0.0
        %554 = vmatpush2.msra.mxu0 0.0
        %555 = vmatprep.subr.mxu0 0.0
        %556 = vmatpush2.msra.mxu0 0.0
        %557 = vmatprep.subr.mxu0 0.0
        %558 = vmatpush2.msra.mxu0 0.0
        %559 = vmatprep.subr.mxu0 0.0
        %560 = vmatpush2.msra.mxu0 0.0
        %561 = vmatprep.subr.mxu0 0.0
        %562 = vmatpush2.msra.mxu0 0.0
        %563 = vmatprep.subr.mxu0 0.0
        %564 = vmatpush2.msra.mxu0 0.0
        %565 = vmatprep.subr.mxu0 0.0
        %566 = vmatpush2.msra.mxu0 0.0
        %567 = vmatprep.subr.mxu0 0.0
        %568 = vmatpush2.msra.mxu0 0.0
        %569 = vmatprep.subr.mxu0 0.0
        %570 = vmatpush2.msra.mxu0 0.0
        %571 = vmatprep.subr.mxu0 0.0
        %572 = vmatpush2.msra.mxu0 0.0
        %573 = vmatprep.subr.mxu0 0.0
        %574 = vmatpush2.msra.mxu0 0.0
        %575 = vmatprep.subr.mxu0 0.0
        %576 = vmatpush2.msra.mxu0 0.0
        %577 = vmatprep.subr.mxu0 0.0
        %578 = vmatpush2.msra.mxu0 0.0
        %579 = vmatprep.subr.mxu0 0.0
        %580 = vmatpush2.msra.mxu0 0.0
        %581 = vmatprep.subr.mxu0 0.0
        %582 = vmatpush2.msra.mxu0 0.0
        %583 = vmatprep.mubr.f32.mxu0 0.0
        %v584 = vand.u32 %v417, 4294901760
        %585 = vmatmul.mubr.f32.gmra.mxu0 %v584
        %v586 = vpop.f32.mrf.mxu0
        %v587 = vadd.f32 %v496, %v586
        %v588 = vpop.f32.mrf.mxu0
        %589 = vmatprep.mubr.f32.mxu0 0.0
        %v590 = vand.u32 %v420, 4294901760
        %591 = vmatmul.mubr.f32.gmra.mxu0 %v590
        %v592 = vpop.f32.mrf.mxu0
        %v593 = vadd.f32 %v506, %v592
        %v594 = vpop.f32.mrf.mxu0
        %595 = vdwg.mxu0
        %596 = vmatprep.subr.mxu0 0.0
        %597 = vmatpush1.msra.mxu0 0.0
        %598 = vmatprep.subr.mxu0 0.0
        %599 = vmatpush1.msra.mxu0 0.0
        %600 = vmatprep.subr.mxu0 0.0
        %601 = vmatpush1.msra.mxu0 0.0
        %602 = vmatprep.subr.mxu0 0.0
        %603 = vmatpush1.msra.mxu0 0.0
        %604 = vmatprep.subr.mxu0 0.0
        %605 = vmatpush1.msra.mxu0 0.0
        %606 = vmatprep.subr.mxu0 0.0
        %607 = vmatpush1.msra.mxu0 0.0
        %608 = vmatprep.subr.mxu0 0.0
        %609 = vmatpush1.msra.mxu0 0.0
        %610 = vmatprep.subr.mxu0 0.0
        %611 = vmatpush1.msra.mxu0 0.0
        %612 = vmatprep.subr.mxu0 0.0
        %613 = vmatpush1.msra.mxu0 0.0
        %614 = vmatprep.subr.mxu0 0.0
        %615 = vmatpush1.msra.mxu0 0.0
        %616 = vmatprep.subr.mxu0 0.0
        %617 = vmatpush1.msra.mxu0 0.0
        %618 = vmatprep.subr.mxu0 0.0
        %619 = vmatpush1.msra.mxu0 0.0
        %620 = vmatprep.subr.mxu0 0.0
        %621 = vmatpush1.msra.mxu0 0.0
        %622 = vmatprep.subr.mxu0 0.0
        %623 = vmatpush1.msra.mxu0 0.0
        %624 = vmatprep.subr.mxu0 0.0
        %v625 = vand.u32 %v413, 4294901760
        %v626 = vsub.f32 %v413, %v625
        %627 = vmatpush1.msra.mxu0 %v626
        %628 = vmatprep.subr.mxu0 0.0
        %v629 = vand.u32 %v408, 4294901760
        %v630 = vsub.f32 %v408, %v629
        %631 = vmatpush1.msra.mxu0 %v630
        %632 = vmatprep.subr.mxu0 0.0
        %633 = vmatpush2.msra.mxu0 0.0
        %634 = vmatprep.subr.mxu0 0.0
        %635 = vmatpush2.msra.mxu0 0.0
        %636 = vmatprep.subr.mxu0 0.0
        %637 = vmatpush2.msra.mxu0 0.0
        %638 = vmatprep.subr.mxu0 0.0
        %639 = vmatpush2.msra.mxu0 0.0
        %640 = vmatprep.subr.mxu0 0.0
        %641 = vmatpush2.msra.mxu0 0.0
        %642 = vmatprep.subr.mxu0 0.0
        %643 = vmatpush2.msra.mxu0 0.0
        %644 = vmatprep.subr.mxu0 0.0
        %645 = vmatpush2.msra.mxu0 0.0
        %646 = vmatprep.subr.mxu0 0.0
        %647 = vmatpush2.msra.mxu0 0.0
        %648 = vmatprep.subr.mxu0 0.0
        %649 = vmatpush2.msra.mxu0 0.0
        %650 = vmatprep.subr.mxu0 0.0
        %651 = vmatpush2.msra.mxu0 0.0
        %652 = vmatprep.subr.mxu0 0.0
        %653 = vmatpush2.msra.mxu0 0.0
        %654 = vmatprep.subr.mxu0 0.0
        %655 = vmatpush2.msra.mxu0 0.0
        %656 = vmatprep.subr.mxu0 0.0
        %657 = vmatpush2.msra.mxu0 0.0
        %658 = vmatprep.subr.mxu0 0.0
        %659 = vmatpush2.msra.mxu0 0.0
        %660 = vmatprep.subr.mxu0 0.0
        %661 = vmatpush2.msra.mxu0 0.0
        %662 = vmatprep.subr.mxu0 0.0
        %663 = vmatpush2.msra.mxu0 0.0
        %664 = vmatprep.mubr.f32.mxu0 0.0
        %v665 = vand.u32 %v417, 4294901760
        %v666 = vsub.f32 %v417, %v665
        %667 = vmatmul.mubr.f32.gmra.mxu0 %v666
        %v668 = vpop.f32.mrf.mxu0
        %v669 = vadd.f32 %v587, %v668
        %v670 = vpop.f32.mrf.mxu0
        %671 = vmatprep.mubr.f32.mxu0 0.0
        %v672 = vand.u32 %v420, 4294901760
        %v673 = vsub.f32 %v420, %v672
        %674 = vmatmul.mubr.f32.gmra.mxu0 %v673
        %v675 = vpop.f32.mrf.mxu0
        %v676 = vadd.f32 %v593, %v675
        %v677 = vpop.f32.mrf.mxu0
        %678 = vdwg.mxu0
        %679 = vmatprep.subr.mxu0 0.0
        %680 = vmatpush1.msra.mxu0 0.0
        %681 = vmatprep.subr.mxu0 0.0
        %682 = vmatpush1.msra.mxu0 0.0
        %683 = vmatprep.subr.mxu0 0.0
        %684 = vmatpush1.msra.mxu0 0.0
        %685 = vmatprep.subr.mxu0 0.0
        %686 = vmatpush1.msra.mxu0 0.0
        %687 = vmatprep.subr.mxu0 0.0
        %688 = vmatpush1.msra.mxu0 0.0
        %689 = vmatprep.subr.mxu0 0.0
        %690 = vmatpush1.msra.mxu0 0.0
        %691 = vmatprep.subr.mxu0 0.0
        %692 = vmatpush1.msra.mxu0 0.0
        %693 = vmatprep.subr.mxu0 0.0
        %694 = vmatpush1.msra.mxu0 0.0
        %695 = vmatprep.subr.mxu0 0.0
        %696 = vmatpush1.msra.mxu0 0.0
        %697 = vmatprep.subr.mxu0 0.0
        %698 = vmatpush1.msra.mxu0 0.0
        %699 = vmatprep.subr.mxu0 0.0
        %700 = vmatpush1.msra.mxu0 0.0
        %701 = vmatprep.subr.mxu0 0.0
        %702 = vmatpush1.msra.mxu0 0.0
        %703 = vmatprep.subr.mxu0 0.0
        %704 = vmatpush1.msra.mxu0 0.0
        %705 = vmatprep.subr.mxu0 0.0
        %706 = vmatpush1.msra.mxu0 0.0
        %707 = vmatprep.subr.mxu0 0.0
        %v708 = vand.u32 %v413, 4294901760
        %709 = vmatpush1.msra.mxu0 %v708
        %710 = vmatprep.subr.mxu0 0.0
        %v711 = vand.u32 %v408, 4294901760
        %712 = vmatpush1.msra.mxu0 %v711
        %713 = vmatprep.subr.mxu0 0.0
        %714 = vmatpush2.msra.mxu0 0.0
        %715 = vmatprep.subr.mxu0 0.0
        %716 = vmatpush2.msra.mxu0 0.0
        %717 = vmatprep.subr.mxu0 0.0
        %718 = vmatpush2.msra.mxu0 0.0
        %719 = vmatprep.subr.mxu0 0.0
        %720 = vmatpush2.msra.mxu0 0.0
        %721 = vmatprep.subr.mxu0 0.0
        %722 = vmatpush2.msra.mxu0 0.0
        %723 = vmatprep.subr.mxu0 0.0
        %724 = vmatpush2.msra.mxu0 0.0
        %725 = vmatprep.subr.mxu0 0.0
        %726 = vmatpush2.msra.mxu0 0.0
        %727 = vmatprep.subr.mxu0 0.0
        %728 = vmatpush2.msra.mxu0 0.0
        %729 = vmatprep.subr.mxu0 0.0
        %730 = vmatpush2.msra.mxu0 0.0
        %731 = vmatprep.subr.mxu0 0.0
        %732 = vmatpush2.msra.mxu0 0.0
        %733 = vmatprep.subr.mxu0 0.0
        %734 = vmatpush2.msra.mxu0 0.0
        %735 = vmatprep.subr.mxu0 0.0
        %736 = vmatpush2.msra.mxu0 0.0
        %737 = vmatprep.subr.mxu0 0.0
        %738 = vmatpush2.msra.mxu0 0.0
        %739 = vmatprep.subr.mxu0 0.0
        %740 = vmatpush2.msra.mxu0 0.0
        %741 = vmatprep.subr.mxu0 0.0
        %742 = vmatpush2.msra.mxu0 0.0
        %743 = vmatprep.subr.mxu0 0.0
        %744 = vmatpush2.msra.mxu0 0.0
        %745 = vmatprep.mubr.f32.mxu0 0.0
        %v746 = vand.u32 %v417, 4294901760
        %v747 = vsub.f32 %v417, %v746
        %v748 = vand.u32 %v747, 4294901760
        %749 = vmatmul.mubr.f32.gmra.mxu0 %v748
        %v750 = vpop.f32.mrf.mxu0
        %v751 = vadd.f32 %v669, %v750
        %v752 = vpop.f32.mrf.mxu0
        %753 = vmatprep.mubr.f32.mxu0 0.0
        %v754 = vand.u32 %v420, 4294901760
        %v755 = vsub.f32 %v420, %v754
        %v756 = vand.u32 %v755, 4294901760
        %757 = vmatmul.mubr.f32.gmra.mxu0 %v756
        %v758 = vpop.f32.mrf.mxu0
        %v759 = vadd.f32 %v676, %v758
        %v760 = vpop.f32.mrf.mxu0
        %761 = vdwg.mxu0
        %762 = vmatprep.subr.mxu0 0.0
        %763 = vmatpush1.msra.mxu0 0.0
        %764 = vmatprep.subr.mxu0 0.0
        %765 = vmatpush1.msra.mxu0 0.0
        %766 = vmatprep.subr.mxu0 0.0
        %767 = vmatpush1.msra.mxu0 0.0
        %768 = vmatprep.subr.mxu0 0.0
        %769 = vmatpush1.msra.mxu0 0.0
        %770 = vmatprep.subr.mxu0 0.0
        %771 = vmatpush1.msra.mxu0 0.0
        %772 = vmatprep.subr.mxu0 0.0
        %773 = vmatpush1.msra.mxu0 0.0
        %774 = vmatprep.subr.mxu0 0.0
        %775 = vmatpush1.msra.mxu0 0.0
        %776 = vmatprep.subr.mxu0 0.0
        %777 = vmatpush1.msra.mxu0 0.0
        %778 = vmatprep.subr.mxu0 0.0
        %779 = vmatpush1.msra.mxu0 0.0
        %780 = vmatprep.subr.mxu0 0.0
        %781 = vmatpush1.msra.mxu0 0.0
        %782 = vmatprep.subr.mxu0 0.0
        %783 = vmatpush1.msra.mxu0 0.0
        %784 = vmatprep.subr.mxu0 0.0
        %785 = vmatpush1.msra.mxu0 0.0
        %786 = vmatprep.subr.mxu0 0.0
        %787 = vmatpush1.msra.mxu0 0.0
        %788 = vmatprep.subr.mxu0 0.0
        %789 = vmatpush1.msra.mxu0 0.0
        %790 = vmatprep.subr.mxu0 0.0
        %v791 = vand.u32 %v413, 4294901760
        %v792 = vsub.f32 %v413, %v791
        %v793 = vand.u32 %v792, 4294901760
        %794 = vmatpush1.msra.mxu0 %v793
        %795 = vmatprep.subr.mxu0 0.0
        %v796 = vand.u32 %v408, 4294901760
        %v797 = vsub.f32 %v408, %v796
        %v798 = vand.u32 %v797, 4294901760
        %799 = vmatpush1.msra.mxu0 %v798
        %800 = vmatprep.subr.mxu0 0.0
        %801 = vmatpush2.msra.mxu0 0.0
        %802 = vmatprep.subr.mxu0 0.0
        %803 = vmatpush2.msra.mxu0 0.0
        %804 = vmatprep.subr.mxu0 0.0
        %805 = vmatpush2.msra.mxu0 0.0
        %806 = vmatprep.subr.mxu0 0.0
        %807 = vmatpush2.msra.mxu0 0.0
        %808 = vmatprep.subr.mxu0 0.0
        %809 = vmatpush2.msra.mxu0 0.0
        %810 = vmatprep.subr.mxu0 0.0
        %811 = vmatpush2.msra.mxu0 0.0
        %812 = vmatprep.subr.mxu0 0.0
        %813 = vmatpush2.msra.mxu0 0.0
        %814 = vmatprep.subr.mxu0 0.0
        %815 = vmatpush2.msra.mxu0 0.0
        %816 = vmatprep.subr.mxu0 0.0
        %817 = vmatpush2.msra.mxu0 0.0
        %818 = vmatprep.subr.mxu0 0.0
        %819 = vmatpush2.msra.mxu0 0.0
        %820 = vmatprep.subr.mxu0 0.0
        %821 = vmatpush2.msra.mxu0 0.0
        %822 = vmatprep.subr.mxu0 0.0
        %823 = vmatpush2.msra.mxu0 0.0
        %824 = vmatprep.subr.mxu0 0.0
        %825 = vmatpush2.msra.mxu0 0.0
        %826 = vmatprep.subr.mxu0 0.0
        %827 = vmatpush2.msra.mxu0 0.0
        %828 = vmatprep.subr.mxu0 0.0
        %829 = vmatpush2.msra.mxu0 0.0
        %830 = vmatprep.subr.mxu0 0.0
        %831 = vmatpush2.msra.mxu0 0.0
        %832 = vmatprep.mubr.f32.mxu0 0.0
        %v833 = vand.u32 %v417, 4294901760
        %834 = vmatmul.mubr.f32.gmra.mxu0 %v833
        %v835 = vpop.f32.mrf.mxu0
        %v836 = vadd.f32 %v751, %v835
        %v837 = vpop.f32.mrf.mxu0
        %838 = vmatprep.mubr.f32.mxu0 0.0
        %v839 = vand.u32 %v420, 4294901760
        %840 = vmatmul.mubr.f32.gmra.mxu0 %v839
        %v841 = vpop.f32.mrf.mxu0
        %v842 = vadd.f32 %v759, %v841
        %v843 = vpop.f32.mrf.mxu0
        %844 = vdwg.mxu0
        %845 = vmatprep.subr.mxu0 0.0
        %846 = vmatpush1.msra.mxu0 0.0
        %847 = vmatprep.subr.mxu0 0.0
        %848 = vmatpush1.msra.mxu0 0.0
        %849 = vmatprep.subr.mxu0 0.0
        %850 = vmatpush1.msra.mxu0 0.0
        %851 = vmatprep.subr.mxu0 0.0
        %852 = vmatpush1.msra.mxu0 0.0
        %853 = vmatprep.subr.mxu0 0.0
        %854 = vmatpush1.msra.mxu0 0.0
        %855 = vmatprep.subr.mxu0 0.0
        %856 = vmatpush1.msra.mxu0 0.0
        %857 = vmatprep.subr.mxu0 0.0
        %858 = vmatpush1.msra.mxu0 0.0
        %859 = vmatprep.subr.mxu0 0.0
        %860 = vmatpush1.msra.mxu0 0.0
        %861 = vmatprep.subr.mxu0 0.0
        %862 = vmatpush1.msra.mxu0 0.0
        %863 = vmatprep.subr.mxu0 0.0
        %864 = vmatpush1.msra.mxu0 0.0
        %865 = vmatprep.subr.mxu0 0.0
        %866 = vmatpush1.msra.mxu0 0.0
        %867 = vmatprep.subr.mxu0 0.0
        %868 = vmatpush1.msra.mxu0 0.0
        %869 = vmatprep.subr.mxu0 0.0
        %870 = vmatpush1.msra.mxu0 0.0
        %871 = vmatprep.subr.mxu0 0.0
        %872 = vmatpush1.msra.mxu0 0.0
        %873 = vmatprep.subr.mxu0 0.0
        %v874 = vand.u32 %v413, 4294901760
        %875 = vmatpush1.msra.mxu0 %v874
        %876 = vmatprep.subr.mxu0 0.0
        %v877 = vand.u32 %v408, 4294901760
        %878 = vmatpush1.msra.mxu0 %v877
        %879 = vmatprep.subr.mxu0 0.0
        %880 = vmatpush2.msra.mxu0 0.0
        %881 = vmatprep.subr.mxu0 0.0
        %882 = vmatpush2.msra.mxu0 0.0
        %883 = vmatprep.subr.mxu0 0.0
        %884 = vmatpush2.msra.mxu0 0.0
        %885 = vmatprep.subr.mxu0 0.0
        %886 = vmatpush2.msra.mxu0 0.0
        %887 = vmatprep.subr.mxu0 0.0
        %888 = vmatpush2.msra.mxu0 0.0
        %889 = vmatprep.subr.mxu0 0.0
        %890 = vmatpush2.msra.mxu0 0.0
        %891 = vmatprep.subr.mxu0 0.0
        %892 = vmatpush2.msra.mxu0 0.0
        %893 = vmatprep.subr.mxu0 0.0
        %894 = vmatpush2.msra.mxu0 0.0
        %895 = vmatprep.subr.mxu0 0.0
        %896 = vmatpush2.msra.mxu0 0.0
        %897 = vmatprep.subr.mxu0 0.0
        %898 = vmatpush2.msra.mxu0 0.0
        %899 = vmatprep.subr.mxu0 0.0
        %900 = vmatpush2.msra.mxu0 0.0
        %901 = vmatprep.subr.mxu0 0.0
        %902 = vmatpush2.msra.mxu0 0.0
        %903 = vmatprep.subr.mxu0 0.0
        %904 = vmatpush2.msra.mxu0 0.0
        %905 = vmatprep.subr.mxu0 0.0
        %906 = vmatpush2.msra.mxu0 0.0
        %907 = vmatprep.subr.mxu0 0.0
        %908 = vmatpush2.msra.mxu0 0.0
        %909 = vmatprep.subr.mxu0 0.0
        %910 = vmatpush2.msra.mxu0 0.0
        %911 = vmatprep.mubr.f32.mxu0 0.0
        %v912 = vand.u32 %v417, 4294901760
        %913 = vmatmul.mubr.f32.gmra.mxu0 %v912
        %v914 = vpop.f32.mrf.mxu0
        %v915 = vadd.f32 %v836, %v914
        %v916 = vpop.f32.mrf.mxu0
        %917 = vmatprep.mubr.f32.mxu0 0.0
        %v918 = vand.u32 %v420, 4294901760
        %919 = vmatmul.mubr.f32.gmra.mxu0 %v918
        %v920 = vpop.f32.mrf.mxu0
        %v921 = vadd.f32 %v842, %v920
        %v922 = vpop.f32.mrf.mxu0
        %923 = vdwg.mxu0
        %v924 = vmax.f32 %v915, %v921
        %v926 = vlaneseq
        %v927 = vshrl.u32 %v926, 7
        %v928 = vsub.s32 0, %v927
        %v929 = vrot.slane %v269, %v928
        %v931 = vadd.f32 %v924, %v929
        %v932 = vmax.f32 %v931, 0.0
        %933 = vst [vmem:[%s244] sm:$0xff] %v932
        %s934 = sand.u32 %s119, 1
        %s935 = scalar_lea.sflag [#allocation5], %s934
        %s936 = sand.u32 %s119, 1
        %s937 = smul.addr %s936, 8
        %s938 = scalar_lea.vmem [#allocation9], %s937
        // Predicated region
        $region49: #{tpu_custom_call.1} parent=35 // pred_check
          %p939 = pneg %p129
        $region50: #{tpu_custom_call.1} parent=35 // pred_check_branch
          %941 = sbr.rel (%p939) target = $region52
        $region51: #{tpu_custom_call.1} parent=35 // pred_region
          %s943 = ssub.s32 128, 128
          %944 = vsyncadd %s935, %s943
          %s945 = smul.addr %s22, 128
          %s946 = scalar_lea.hbm %s4, %s945
          %s948 = sshll.u32 %s938, 4
          %s949 = int_to_ptr.vmem [resolvable:$true] %s948
          %951 = dma.vmem_to_hbm [thread:$0]  %s949, 128, %s946, %s935
        $region52: #{tpu_custom_call.1} parent=35 // pred_fallthru
          _
      $region36: #{tpu_custom_call.1} parent=5 // pred_fallthru
        _
      %p952 = scmp.le.s32.totalorder 2, %s17
      // Predicated region
      $region53: #{tpu_custom_call.1} parent=5 // pred_check
        %p953 = pneg %p952
      $region54: #{tpu_custom_call.1} parent=5 // pred_check_branch
        %955 = sbr.rel (%p953) target = $region56
      $region55: #{tpu_custom_call.1} parent=5 // pred_region
        %s956 = ssub.s32 %s17, 2
        // Predicated region
        $region57: #{tpu_custom_call.1} parent=55 // pred_check
          %p957 = pneg %p135
        $region58: #{tpu_custom_call.1} parent=55 // pred_check_branch
          %959 = sbr.rel (%p957) target = $region60
        $region59: #{tpu_custom_call.1} parent=55 // pred_region
          %s960 = sand.u32 %s120, 1
          %s961 = scalar_lea.sflag [#allocation5], %s960
          %s962 = sand.u32 %s120, 1
          %s963 = smul.addr %s962, 8
          %s964 = scalar_lea.vmem [#allocation9], %s963
          %965 = dma.done %s961, 128
        $region60: #{tpu_custom_call.1} parent=55 // pred_fallthru
          _
      $region56: #{tpu_custom_call.1} parent=5 // pred_fallthru
        _
    $region6: #{tpu_custom_call.1} parent=1 // loop_footer
      %s21 = sadd.s32 1, %s17
    $region7: #{tpu_custom_call.1} parent=1 // loop_footer_branch
      %16 = sbr.rel target = $region3
    $region8: #{tpu_custom_call.1} parent=1 // loop_exit
      _
    %966 = vsyncpa [#allocation4], 1
    %s967 = scalar_lea.sflag [#allocation4], 1
    %968 = vsyncpa %s967, 1
    %969 = vsyncpa [#allocation7], 1
    %970 = vsyncpa [#allocation5], 1
    %s971 = scalar_lea.sflag [#allocation5], 1
    %972 = vsyncpa %s971, 1

</llo_original>
